<compile_context>
chip_gen: v6e
topology: v6e:2x2x1
jax: 0.10.0
libtpu: 0.0.40
codegen_flags: <defaults>
</compile_context>

<pallas_src>
import jax
import jax.numpy as jnp
from jax.experimental import pallas as pl
from jax.experimental.pallas import tpu as pltpu


def _round_up(a, b):
    return (a + b - 1) // b * b


# ----------------------------------------------------------------------------
# Kernel A: per-lane-column reduction -> resident (1, 8, W) f32 accumulators
# (sum and sum of squares), accumulated across the inner "arbitrary" grid axis
# and split across cores on the leading "parallel" axis.  Only full tiles are
# fed here; the ragged leftover (< one tile) is reduced in the wrapper.
# ----------------------------------------------------------------------------
def _stats_kernel(x_ref, sum_ref, sq_ref):
    @pl.when(pl.program_id(1) == 0)
    def _():
        sum_ref[...] = jnp.zeros_like(sum_ref)
        sq_ref[...] = jnp.zeros_like(sq_ref)

    x = x_ref[...].astype(jnp.float32)            # (tile, W)
    t, w = x.shape
    x3 = x.reshape(t // 8, 8, w)                  # keep sublane axis; cheap reduce
    sum_ref[...] += jnp.sum(x3, axis=0)[None]     # (1, 8, W)
    sq_ref[...] += jnp.sum(x3 * x3, axis=0)[None]
    # TODO(synk): if bundle dumps on v7x/bf16 show VALU saturation or vreg
    # spills at large tiles, chunk this with lax.fori_loop or offload the
    # reduction to the MXU (ones @ x); not needed at f32 HBM rates.


# ----------------------------------------------------------------------------
# Kernel B: pure streaming FMA  out = x * scale + bias  (scale = 1/std,
# bias = -mean/std precomputed in the wrapper), output in x's native dtype.
# ----------------------------------------------------------------------------
def _normalize_kernel(x_ref, scale_ref, bias_ref, o_ref):
    x = x_ref[...].astype(jnp.float32)
    o_ref[...] = (x * scale_ref[...] + bias_ref[...]).astype(o_ref.dtype)


# ----------------------------------------------------------------------------
# Wrapper: pooling/unpooling, lane packing, generation-aware tile selection,
# functional buffer updates (mirrors the PyTorch registered buffers).
# ----------------------------------------------------------------------------
def init_normalizer_state(size):
    """Mirrors Normalizer.__init__ buffers (deterministic zeros)."""
    (h,) = size
    return {
        "count": jnp.zeros((), jnp.float32),
        "n_accumulations": jnp.zeros((), jnp.float32),
        "sum": jnp.zeros((h,), jnp.float32),
        "sum_squared": jnp.zeros((h,), jnp.float32),
    }


def _hw_params():
    """Generation-aware VMEM budget / stats split (heuristic on VMEM size)."""
    cap = 128 * 2 ** 20
    try:
        info = pltpu.get_tpu_info()
        cap = int(getattr(info, "vmem_capacity_bytes", 0)) or cap
    except Exception:
        pass
    if cap <= 80 * 2 ** 20:
        # v7x-like: 64 MiB VMEM per TC, 2 TCs/chip -> tight budget, 2-way split.
        return {"budget": 16 * 2 ** 20, "vmem_limit": 56 * 2 ** 20, "splits": 2}
    # v5e/v6e: 128 MiB VMEM, single TC -> bigger tiles, no split.
    return {"budget": 40 * 2 ** 20, "vmem_limit": 96 * 2 ** 20, "splits": 1}


def normalizer_forward(x, state, *, training=True, max_accumulations=10 ** 6,
                       std_epsilon=1e-8, tile_rows=8192, stat_splits=None):
    """Returns (normalized_x, new_state). Matches Normalizer.forward.

    `training` must be a static Python bool (as in nn.Module.training).
    """
    orig_shape = x.shape
    orig_dtype = x.dtype
    h = orig_shape[-1]
    xf = x.reshape((-1, h))                        # pool: (N, h), native dtype
    n_rows = xf.shape[0]

    # Lane packing: fold k consecutive rows into the lane axis when h divides
    # 128 and N is divisible by k (free reshape, no copy).
    if h < 128 and 128 % h == 0 and n_rows % (128 // h) == 0:
        k = 128 // h
    else:
        # TODO(synk): awkward h (non-divisor / non-multiple of 128) or ragged
        # N falls back to the unpacked layout with masked lane-tail stores.
        k = 1
    w = k * h
    m_rows = n_rows // k
    xp = xf.reshape(m_rows, w) if k > 1 else xf    # lane-dense packed view

    hw = _hw_params()
    vmem_limit = hw["vmem_limit"]
    splits_req = hw["splits"] if stat_splits is None else max(1, int(stat_splits))

    # Tile selection: as large as the (double-buffered in+out) budget allows.
    item = jnp.dtype(orig_dtype).itemsize
    tile_cap = max(8, (hw["budget"] // (w * 2 * item)) // 8 * 8)
    tile = max(8, min(_round_up(tile_rows, 8), tile_cap, _round_up(m_rows, 8)))

    # --- Stats pass (training only; statically skipped at eval) ---------------
    if training:
        n_full = m_rows // tile                    # full tiles fed to kernel A
        x_sum = jnp.zeros((h,), jnp.float32)
        x_sq = jnp.zeros((h,), jnp.float32)
        if n_full >= 1:
            splits = splits_req if (splits_req > 1 and n_full % splits_req == 0) else 1
            tps = n_full // splits
            psum, psq = pl.pallas_call(
                _stats_kernel,
                out_shape=(jax.ShapeDtypeStruct((splits, 8, w), jnp.float32),
                           jax.ShapeDtypeStruct((splits, 8, w), jnp.float32)),
                grid_spec=pltpu.PrefetchScalarGridSpec(
                    num_scalar_prefetch=0,
                    grid=(splits, tps),
                    in_specs=[pl.BlockSpec((tile, w),
                                           lambda c, i: (c * tps + i, 0))],
                    out_specs=(pl.BlockSpec((1, 8, w), lambda c, i: (c, 0, 0)),
                               pl.BlockSpec((1, 8, w), lambda c, i: (c, 0, 0)))),
                compiler_params=pltpu.CompilerParams(
                    dimension_semantics=("parallel", "arbitrary"),
                    vmem_limit_bytes=vmem_limit),
            )(xp)
            # Fold split / sublane / lane-pack partials -> per-channel stats.
            x_sum = psum.sum(axis=(0, 1)).reshape(k, h).sum(0)
            x_sq = psq.sum(axis=(0, 1)).reshape(k, h).sum(0)
        # Ragged leftover (< one tile of packed rows): reduce in the wrapper.
        tail_start = n_full * tile * k             # in unpacked-row units
        if tail_start < n_rows:
            xt = xf[tail_start:].astype(jnp.float32)
            x_sum = x_sum + xt.sum(0)
            x_sq = x_sq + (xt * xt).sum(0)

        # Conditional accumulation (dynamic gate, matches _accumulate).
        do_acc = state["n_accumulations"] < max_accumulations
        gate = do_acc.astype(jnp.float32)
        new_sum = state["sum"] + gate * x_sum
        new_sq = state["sum_squared"] + gate * x_sq
        new_count = state["count"] + gate * jnp.float32(n_rows)
        new_nacc = state["n_accumulations"] + gate
    else:
        new_sum = state["sum"]
        new_sq = state["sum_squared"]
        new_count = state["count"]
        new_nacc = state["n_accumulations"]

    # mean/std math hoisted out of the kernel: scale = 1/std, bias = -mean/std.
    safe_count = jnp.maximum(new_count, jnp.float32(1.0))
    mean = new_sum / safe_count
    var = jnp.maximum(new_sq / safe_count - mean * mean, 0.0)   # clamp fp cancel
    std = jnp.maximum(jnp.sqrt(var), jnp.float32(std_epsilon))
    scale = 1.0 / std
    bias = -mean * scale
    scale_w = jnp.tile(scale, k).reshape(1, w).astype(jnp.float32)
    bias_w = jnp.tile(bias, k).reshape(1, w).astype(jnp.float32)

    # --- Normalize pass: cdiv grid, OOB writes of the last block are masked ---
    n_tiles = -(-m_rows // tile)
    out_p = pl.pallas_call(
        _normalize_kernel,
        out_shape=jax.ShapeDtypeStruct((m_rows, w), orig_dtype),
        grid_spec=pltpu.PrefetchScalarGridSpec(
            num_scalar_prefetch=0,
            grid=(n_tiles,),
            in_specs=[pl.BlockSpec((tile, w), lambda i: (i, 0)),
                      pl.BlockSpec((1, w), lambda i: (0, 0)),
                      pl.BlockSpec((1, w), lambda i: (0, 0))],
            out_specs=pl.BlockSpec((tile, w), lambda i: (i, 0))),
        compiler_params=pltpu.CompilerParams(
            dimension_semantics=("parallel",),
            vmem_limit_bytes=vmem_limit),
    )(xp, scale_w, bias_w)

    out = out_p.reshape(orig_shape)                # unpool (free reshape)

    new_state = {
        "count": new_count,
        "n_accumulations": new_nacc,
        "sum": new_sum,
        "sum_squared": new_sq,
    }
    return out, new_state


# ----------------------------------------------------------------------------
# Pure-JAX references for correctness checks.
# ----------------------------------------------------------------------------
def _normalize_with_state(x, state, std_epsilon=1e-8):
    safe = jnp.maximum(state["count"], 1.0)
    mean = state["sum"] / safe
    var = jnp.maximum(state["sum_squared"] / safe - mean ** 2, 0.0)
    std = jnp.maximum(jnp.sqrt(var), std_epsilon)
    return ((x.astype(jnp.float32) - mean) / std).astype(x.dtype)


def _reference_forward(x, state, std_epsilon=1e-8):
    h = x.shape[-1]
    xf = x.reshape((-1, h)).astype(jnp.float32)
    new_state = {
        "sum": state["sum"] + xf.sum(0),
        "sum_squared": state["sum_squared"] + (xf ** 2).sum(0),
        "count": state["count"] + jnp.float32(xf.shape[0]),
        "n_accumulations": state["n_accumulations"] + 1.0,
    }
    return _normalize_with_state(x, new_state, std_epsilon), new_state


if __name__ == "__main__":
    key = jax.random.PRNGKey(0)
    # x: (batch=2, spatial=8x8, hidden=32) -> pooled rows N = 128 (packed path)
    x = jax.random.normal(key, (2, 8, 8, 32), dtype=jnp.float32)

    state = init_normalizer_state((32,))
    out, new_state = normalizer_forward(x, state, training=True)
    out = jax.block_until_ready(out)

    ref, ref_state = _reference_forward(x, state)
    assert out.shape == x.shape and out.dtype == x.dtype
    assert jnp.allclose(out, ref, rtol=1e-5, atol=1e-5), "mismatch vs reference"
    assert jnp.allclose(new_state["count"], jnp.float32(2 * 8 * 8))
    assert jnp.allclose(new_state["n_accumulations"], jnp.float32(1.0))
    assert jnp.allclose(new_state["sum"], ref_state["sum"], rtol=1e-5, atol=1e-5)
    assert jnp.allclose(new_state["sum_squared"], ref_state["sum_squared"],
                        rtol=1e-5, atol=1e-5)

    # Odd shape: exercises the unpacked fallback, partial final block, and the
    # wrapper-side ragged-tail stats path (no jnp.pad anywhere).
    x2 = jax.random.normal(jax.random.PRNGKey(1), (3, 5, 7, 32),
                           dtype=jnp.float32)
    out2, state2 = normalizer_forward(x2, new_state, training=True)
    out2 = jax.block_until_ready(out2)
    ref2, ref_state2 = _reference_forward(x2, new_state)
    assert jnp.allclose(out2, ref2, rtol=1e-5, atol=1e-5), "mismatch (odd shape)"
    assert jnp.allclose(state2["count"], jnp.float32(2 * 8 * 8 + 3 * 5 * 7))

    # Eval mode: the stats kernel is statically skipped, buffers untouched.
    out3, state3 = normalizer_forward(x2, state2, training=False)
    out3 = jax.block_until_ready(out3)
    ref3 = _normalize_with_state(x2, state2)
    assert jnp.allclose(out3, ref3, rtol=1e-5, atol=1e-5), "mismatch (eval)"
    assert jnp.allclose(state3["count"], state2["count"])
    assert jnp.allclose(state3["n_accumulations"], state2["n_accumulations"])

    print("KERNEL_OK")
</pallas_src>

<mosaic_0001>
module attributes {stable_mosaic.version = 11 : i64} {
  func.func @_stats_kernel(%arg0: i32, %arg1: i32, %arg2: memref<32x128xf32, #tpu.memory_space<vmem>>, %arg3: memref<1x8x128xf32, #tpu.memory_space<vmem>>, %arg4: memref<1x8x128xf32, #tpu.memory_space<vmem>>) attributes {dimension_semantics = [#tpu.dimension_semantics<parallel>, #tpu.dimension_semantics<arbitrary>], iteration_bounds = array<i64: 1, 1>, scalar_prefetch = 0 : i64, scratch_operands = 0 : i64, tpu.core_type = #tpu.core_type<tc>, window_params = [{transform_indices = @transform_0, window_bounds = array<i64: 32, 128>}, {transform_indices = @transform_1, window_bounds = array<i64: 1, 8, 128>}, {transform_indices = @transform_2, window_bounds = array<i64: 1, 8, 128>}]} {
    %c0_i32 = arith.constant 0 : i32
    %0 = arith.cmpi eq, %arg1, %c0_i32 : i32
    %1 = arith.extui %0 : i1 to i32
    %c0_i32_0 = arith.constant 0 : i32
    %2 = arith.cmpi ne, %1, %c0_i32_0 : i32
    scf.if %2 {
      %cst_15 = arith.constant 0.000000e+00 : f32
      %16 = vector.broadcast %cst_15 : f32 to vector<1x8x128xf32>
      %c0_16 = arith.constant 0 : index
      %c0_17 = arith.constant 0 : index
      %c0_18 = arith.constant 0 : index
      %17 = vector.load %arg3[%c0_16, %c0_17, %c0_18] : memref<1x8x128xf32, #tpu.memory_space<vmem>>, vector<1x8x128xf32>
      tpu.vector_store %arg3[%c0_16, %c0_17, %c0_18], %16 {strides = array<i32>} : memref<1x8x128xf32, #tpu.memory_space<vmem>>, vector<1x8x128xf32>,
      %cst_19 = arith.constant 0.000000e+00 : f32
      %18 = vector.broadcast %cst_19 : f32 to vector<1x8x128xf32>
      %c0_20 = arith.constant 0 : index
      %c0_21 = arith.constant 0 : index
      %c0_22 = arith.constant 0 : index
      %19 = vector.load %arg4[%c0_20, %c0_21, %c0_22] : memref<1x8x128xf32, #tpu.memory_space<vmem>>, vector<1x8x128xf32>
      tpu.vector_store %arg4[%c0_20, %c0_21, %c0_22], %18 {strides = array<i32>} : memref<1x8x128xf32, #tpu.memory_space<vmem>>, vector<1x8x128xf32>,
    } else {
    }
    %c0 = arith.constant 0 : index
    %c0_1 = arith.constant 0 : index
    %3 = vector.load %arg2[%c0, %c0_1] : memref<32x128xf32, #tpu.memory_space<vmem>>, vector<32x128xf32>
    %4 = vector.shape_cast %3 : vector<32x128xf32> to vector<4x8x128xf32>
    %c0_2 = arith.constant 0 : index
    %c0_3 = arith.constant 0 : index
    %c0_4 = arith.constant 0 : index
    %5 = vector.load %arg3[%c0_2, %c0_3, %c0_4] : memref<1x8x128xf32, #tpu.memory_space<vmem>>, vector<1x8x128xf32>
    %cst = arith.constant dense<0.000000e+00> : vector<8x128xf32>
    %6 = vector.multi_reduction <add>, %4, %cst [0] : vector<4x8x128xf32> to vector<8x128xf32>
    %7 = vector.shape_cast %6 : vector<8x128xf32> to vector<1x8x128xf32>
    %8 = arith.addf %5, %7 : vector<1x8x128xf32>
    %c0_5 = arith.constant 0 : index
    %c0_6 = arith.constant 0 : index
    %c0_7 = arith.constant 0 : index
    %9 = vector.load %arg3[%c0_5, %c0_6, %c0_7] : memref<1x8x128xf32, #tpu.memory_space<vmem>>, vector<1x8x128xf32>
    tpu.vector_store %arg3[%c0_5, %c0_6, %c0_7], %8 {strides = array<i32>} : memref<1x8x128xf32, #tpu.memory_space<vmem>>, vector<1x8x128xf32>,
    %c0_8 = arith.constant 0 : index
    %c0_9 = arith.constant 0 : index
    %c0_10 = arith.constant 0 : index
    %10 = vector.load %arg4[%c0_8, %c0_9, %c0_10] : memref<1x8x128xf32, #tpu.memory_space<vmem>>, vector<1x8x128xf32>
    %11 = arith.mulf %4, %4 : vector<4x8x128xf32>
    %cst_11 = arith.constant dense<0.000000e+00> : vector<8x128xf32>
    %12 = vector.multi_reduction <add>, %11, %cst_11 [0] : vector<4x8x128xf32> to vector<8x128xf32>
    %13 = vector.shape_cast %12 : vector<8x128xf32> to vector<1x8x128xf32>
    %14 = arith.addf %10, %13 : vector<1x8x128xf32>
    %c0_12 = arith.constant 0 : index
    %c0_13 = arith.constant 0 : index
    %c0_14 = arith.constant 0 : index
    %15 = vector.load %arg4[%c0_12, %c0_13, %c0_14] : memref<1x8x128xf32, #tpu.memory_space<vmem>>, vector<1x8x128xf32>
    tpu.vector_store %arg4[%c0_12, %c0_13, %c0_14], %14 {strides = array<i32>} : memref<1x8x128xf32, #tpu.memory_space<vmem>>, vector<1x8x128xf32>,
    return
  }
  func.func @transform_0(%arg0: i32, %arg1: i32) -> (i32, i32) {
    %c1_i32 = arith.constant 1 : i32
    %0 = arith.muli %arg0, %c1_i32 : i32
    %1 = arith.addi %0, %arg1 : i32
    %c0_i32 = arith.constant 0 : i32
    %c0_i32_0 = arith.constant 0 : i32
    return %1, %c0_i32 : i32, i32
  }
  func.func @transform_1(%arg0: i32, %arg1: i32) -> (i32, i32, i32) {
    %c0_i32 = arith.constant 0 : i32
    %c0_i32_0 = arith.constant 0 : i32
    %c0_i32_1 = arith.constant 0 : i32
    return %arg0, %c0_i32, %c0_i32_0 : i32, i32, i32
  }
  func.func @transform_2(%arg0: i32, %arg1: i32) -> (i32, i32, i32) {
    %c0_i32 = arith.constant 0 : i32
    %c0_i32_0 = arith.constant 0 : i32
    %c0_i32_1 = arith.constant 0 : i32
    return %arg0, %c0_i32, %c0_i32_0 : i32, i32, i32
  }
}

</mosaic_0001>

<llo_original>
// kernel: tpu_custom_call.1
$region0: #{tpu_custom_call.1}
  #allocation0 [shape = 'u32[]', space=smem, size = 0x4, offset = 0x4, fixed_abs, tag = 'smem constant byte address 0x4 - core index']
  #allocation1 [shape = 'u32[144,128]{1,0:T(1,128)}', space=vmem, size = 0x12000, scoped, tag = 'internal scratch']
  %s0 = inlined_call_operand.hbm [shape: f32[32,128], index: 0, kind: input, shape index: {}]
  %s1 = inlined_call_operand.hbm [shape: f32[1,8,128], index: 1, kind: output, shape index: {0}]
  %s2 = inlined_call_operand.hbm [shape: f32[1,8,128], index: 2, kind: output, shape index: {1}]
  %3 = xla_tuple %s1, %s2
  %s4 = sld [smem:[#allocation0]]
  $region30: #{tpu_custom_call.1} parent=0
    _
  %s6 = ssub.s32 1, %s4
  %s7 = scalar_select 0, %s6, %s4
  $region1: #{tpu_custom_call.1} parent=0
    #allocation2 [shape = 'u8[16384]{0}', space=vmem, size = 0x4000, scoped, tag = 'input window, operand 0, single buffered']
    #allocation3 [shape = 's32[1]{0}', space=sflag, size = 0x4, scoped, tag = 'scoped memory for tpu_custom_call.1']
    #allocation4 [shape = 's32[1]{0}', space=sflag, size = 0x4, scoped, tag = 'scoped memory for tpu_custom_call.1']
    #allocation5 [shape = 'u8[4096]{0}', space=vmem, size = 0x1000, scoped, tag = 'output window, operand 0, single buffered']
    #allocation6 [shape = 'u8[4096]{0}', space=vmem, size = 0x1000, scoped, tag = 'output window, operand 1, single buffered']
    #allocation7 [shape = 's32[1]{0}', space=sflag, size = 0x4, scoped, tag = 'scoped memory for tpu_custom_call.1']
    %8 = vsyncpa [#allocation3], 0
    %9 = vsyncpa [#allocation4], 0
    %10 = vsyncpa [#allocation7], 0
    // Predicated region
    $region2: #{tpu_custom_call.1} parent=1 // pred_check
      _
    $region3: #{tpu_custom_call.1} parent=1 // pred_check_branch
      %12 = sbr.rel (0) target = $region5
    $region4: #{tpu_custom_call.1} parent=1 // pred_region
      %s13 = sadd.s32 0, 0
      %s14 = smul.u32 4, %s13
      %s16 = ssub.s32 512, 512
      %17 = vsyncadd [#allocation3], %s16
      %s18 = smul.addr %s14, 128
      %s19 = scalar_lea.hbm %s0, %s18
      %s20 = sshll.u32 [#allocation2], 4
      %s21 = int_to_ptr.vmem [resolvable:$true] %s20
      %26 = dma.hbm_to_vmem [thread:$0]  %s19, 512, %s21, [#allocation3], 128, 128, 8
    $region5: #{tpu_custom_call.1} parent=1 // pred_fallthru
      _
    // Predicated region
    $region6: #{tpu_custom_call.1} parent=1 // pred_check
      _
    $region7: #{tpu_custom_call.1} parent=1 // pred_check_branch
      %28 = sbr.rel (0) target = $region9
    $region8: #{tpu_custom_call.1} parent=1 // pred_region
      %29 = dma.done [#allocation3], 512
    $region9: #{tpu_custom_call.1} parent=1 // pred_fallthru
      _
    %s30 = sadd.s32 0, 0
    %s31 = smul.u32 4, %s30
    %p32 = scmp.eq.s32.totalorder 0, 0
    // Predicated region
    $region10: #{tpu_custom_call.1} parent=1 // pred_check
      %p33 = pneg %p32
    $region11: #{tpu_custom_call.1} parent=1 // pred_check_branch
      %35 = sbr.rel (%p33) target = $region13
    $region12: #{tpu_custom_call.1} parent=1 // pred_region
      %36 = vst [vmem:[#allocation5] sm:$0xff] 0.0
      %37 = vst [vmem:[#allocation6] sm:$0xff] 0.0
    $region13: #{tpu_custom_call.1} parent=1 // pred_fallthru
      _
    %v38 = vld [vmem:[#allocation2] sm:$0xff]
    %v39 = vld [vmem:[#allocation2 + $0x8] sm:$0xff]
    %v40 = vld [vmem:[#allocation2 + $0x10] sm:$0xff]
    %v41 = vld [vmem:[#allocation2 + $0x18] sm:$0xff]
    %v42 = vld [vmem:[#allocation5] sm:$0xff]
    %v43 = vadd.f32 %v38, %v39
    %v44 = vadd.f32 %v43, %v40
    %v45 = vadd.f32 %v44, %v41
    %v46 = vadd.f32 %v42, %v45
    %47 = vst [vmem:[#allocation5] sm:$0xff] %v46
    %v48 = vld [vmem:[#allocation6] sm:$0xff]
    %v49 = vmul.f32 %v38, %v38
    %v50 = vmul.f32 %v39, %v39
    %v51 = vmul.f32 %v40, %v40
    %v52 = vmul.f32 %v41, %v41
    %v53 = vadd.f32 %v49, %v50
    %v54 = vadd.f32 %v53, %v51
    %v55 = vadd.f32 %v54, %v52
    %v56 = vadd.f32 %v48, %v55
    %57 = vst [vmem:[#allocation6] sm:$0xff] %v56
    // Predicated region
    $region14: #{tpu_custom_call.1} parent=1 // pred_check
      _
    $region15: #{tpu_custom_call.1} parent=1 // pred_check_branch
      %59 = sbr.rel (0) target = $region17
    $region16: #{tpu_custom_call.1} parent=1 // pred_region
      %s61 = ssub.s32 128, 128
      %62 = vsyncadd [#allocation4], %s61
      %s64 = sshll.u32 [#allocation5], 4
      %s65 = int_to_ptr.vmem [resolvable:$true] %s64
      %67 = dma.vmem_to_hbm [thread:$0]  %s65, 128, %s1, [#allocation4]
    $region17: #{tpu_custom_call.1} parent=1 // pred_fallthru
      _
    // Predicated region
    $region18: #{tpu_custom_call.1} parent=1 // pred_check
      _
    $region19: #{tpu_custom_call.1} parent=1 // pred_check_branch
      %69 = sbr.rel (0) target = $region21
    $region20: #{tpu_custom_call.1} parent=1 // pred_region
      %s71 = ssub.s32 128, 128
      %72 = vsyncadd [#allocation7], %s71
      %s74 = sshll.u32 [#allocation6], 4
      %s75 = int_to_ptr.vmem [resolvable:$true] %s74
      %77 = dma.vmem_to_hbm [thread:$0]  %s75, 128, %s2, [#allocation7]
    $region21: #{tpu_custom_call.1} parent=1 // pred_fallthru
      _
    // Predicated region
    $region22: #{tpu_custom_call.1} parent=1 // pred_check
      _
    $region23: #{tpu_custom_call.1} parent=1 // pred_check_branch
      %79 = sbr.rel (0) target = $region25
    $region24: #{tpu_custom_call.1} parent=1 // pred_region
      %80 = dma.done [#allocation4], 128
    $region25: #{tpu_custom_call.1} parent=1 // pred_fallthru
      _
    // Predicated region
    $region26: #{tpu_custom_call.1} parent=1 // pred_check
      _
    $region27: #{tpu_custom_call.1} parent=1 // pred_check_branch
      %82 = sbr.rel (0) target = $region29
    $region28: #{tpu_custom_call.1} parent=1 // pred_region
      %83 = dma.done [#allocation7], 128
    $region29: #{tpu_custom_call.1} parent=1 // pred_fallthru
      _
    %84 = vsyncpa [#allocation3], 1
    %85 = vsyncpa [#allocation4], 1
    %86 = vsyncpa [#allocation7], 1

</llo_original>
